<compile_context>
chip_gen: v5e
topology: v5e:2x2
jax: 0.10.0
libtpu: 0.0.40
codegen_flags: <defaults>
</compile_context>

<pallas_src>
import jax
import jax.numpy as jnp
from jax.experimental import pallas as pl
from jax.experimental.pallas import tpu as pltpu

HIDDEN = 1024
LANE = 128
REG_DIM = 4


def _round_up(x, m):
    return (x + m - 1) // m * m


def subnet_kernel(x_ref, w_ref, b_ref, out_ref):
    # [tm, C_in] f32 -> bf16 in-kernel, @ [C_in, out_pad] bf16 (MXU, f32 acc),
    # + f32 bias, stored as a lane-dense bf16 tile.
    x_bf = x_ref[...].astype(jnp.bfloat16)
    acc = jnp.dot(x_bf, w_ref[...], preferred_element_type=jnp.float32)
    out_ref[...] = (acc + b_ref[...]).astype(out_ref.dtype)


def prepare_subnet_params(w_fc, b_fc, w_cls, b_cls, w_reg, b_reg):
    """One-time fold of fc -> {cls, reg}.  The module has NO activation between
    fc and the heads, so the composition is a single affine map.

    Returns (w_eff bf16 [C_in, out_pad], b_eff f32 [1, out_pad], class_num).
    Invariant: padded columns carry zero weight AND zero bias.
    """
    class_num = w_cls.shape[1]
    out_dim = class_num + REG_DIM
    out_pad = _round_up(out_dim, LANE)

    w_head = jnp.concatenate([w_cls, w_reg], axis=1)       # [1024, out_dim]
    b_head = jnp.concatenate([b_cls, b_reg], axis=1)       # [1, out_dim]

    w_eff = jnp.dot(w_fc.astype(jnp.float32), w_head.astype(jnp.float32))
    b_eff = jnp.dot(b_fc.astype(jnp.float32), w_head.astype(jnp.float32)) + b_head

    w_eff = jnp.pad(w_eff, ((0, 0), (0, out_pad - out_dim))).astype(jnp.bfloat16)
    b_eff = jnp.pad(b_eff, ((0, 0), (0, out_pad - out_dim))).astype(jnp.float32)
    return w_eff, b_eff, class_num


def _pick_tm(n_rows, tm_max=1024):
    # Aim for >=2 grid steps whenever the batch allows it (v7x megacore), keep
    # tm a multiple of 16 (bf16 sublane packing of the output tile).
    half = (n_rows + 1) // 2
    return max(16, min(tm_max, _round_up(half, 16)))


def subnet_forward(x, w_eff, b_eff, class_num, *, tm=None):
    """(sub_cls, sub_reg) = SubNet(x) using pre-folded params."""
    N, c_in = x.shape
    out_pad = w_eff.shape[1]
    out_dim = class_num + REG_DIM
    if tm is None:
        tm = _pick_tm(N)

    grid = (pl.cdiv(N, tm),)        # ragged edge: OOB reads masked-garbage, OOB writes dropped
    rows = lambda i: (i, 0)         # x / output: tile over batch rows
    fixed = lambda i: (0, 0)        # folded weight / bias: resident every step

    out = pl.pallas_call(
        subnet_kernel,
        out_shape=jax.ShapeDtypeStruct((N, out_pad), jnp.bfloat16),
        grid_spec=pltpu.PrefetchScalarGridSpec(
            num_scalar_prefetch=0,
            grid=grid,
            in_specs=[
                pl.BlockSpec((tm, c_in), rows),        # x tile (f32 in HBM)
                pl.BlockSpec((c_in, out_pad), fixed),  # folded weight (bf16)
                pl.BlockSpec((1, out_pad), fixed),     # folded bias (f32)
            ],
            out_specs=pl.BlockSpec((tm, out_pad), rows),
        ),
        compiler_params=pltpu.CompilerParams(
            dimension_semantics=("parallel",),
            vmem_limit_bytes=32 * 1024 * 1024,   # safe on v5e/v6e/v7x scoped limits
        ),
    )(x, w_eff, b_eff)

    # Split the fused lane-dense output back into (cls, reg); return f32 like
    # the original module.  This reads only the real out_dim columns.
    sub_cls = out[:, :class_num].astype(jnp.float32)
    sub_reg = out[:, class_num:out_dim].astype(jnp.float32)
    return sub_cls, sub_reg


if __name__ == "__main__":
    # Small, forward-consistent shapes.
    N = 8            # batch of feature vectors
    C_IN = 32        # in_channels
    CLASS_NUM = 16   # class_num

    key = jax.random.PRNGKey(0)
    kx, k1, k2, k3, k4, k5, k6 = jax.random.split(key, 7)

    x = jax.random.normal(kx, (N, C_IN), dtype=jnp.float32)

    # Deterministic synthetic params (Linear weight stored as [in, out]).
    w_fc = jax.random.normal(k1, (C_IN, HIDDEN), dtype=jnp.float32) * 0.02
    b_fc = jax.random.normal(k2, (1, HIDDEN), dtype=jnp.float32) * 0.01
    w_cls = jax.random.normal(k3, (HIDDEN, CLASS_NUM), dtype=jnp.float32) * 0.02
    b_cls = jax.random.normal(k4, (1, CLASS_NUM), dtype=jnp.float32) * 0.01
    w_reg = jax.random.normal(k5, (HIDDEN, 4), dtype=jnp.float32) * 0.02
    b_reg = jax.random.normal(k6, (1, 4), dtype=jnp.float32) * 0.01

    # One-time param fold (hoisted out of the per-call path).
    w_eff, b_eff, class_num = prepare_subnet_params(
        w_fc, b_fc, w_cls, b_cls, w_reg, b_reg)
    w_eff, b_eff = jax.block_until_ready((w_eff, b_eff))

    sub_cls, sub_reg = subnet_forward(x, w_eff, b_eff, class_num)
    jax.block_until_ready((sub_cls, sub_reg))

    # f32 reference of the original (unfolded) PyTorch forward.
    h_ref = x @ w_fc + b_fc
    cls_ref = h_ref @ w_cls + b_cls
    reg_ref = h_ref @ w_reg + b_reg

    assert sub_cls.shape == (N, CLASS_NUM) and sub_reg.shape == (N, 4)
    assert jnp.allclose(sub_cls, cls_ref, atol=2e-2, rtol=2e-2)
    assert jnp.allclose(sub_reg, reg_ref, atol=2e-2, rtol=2e-2)

    print("KERNEL_OK")
</pallas_src>

<mosaic_0001>
module attributes {stable_mosaic.version = 11 : i64} {
  func.func @subnet_kernel(%arg0: i32, %arg1: memref<16x32xf32, #tpu.memory_space<vmem>>, %arg2: memref<32x128xbf16, #tpu.memory_space<vmem>>, %arg3: memref<1x128xf32, #tpu.memory_space<vmem>>, %arg4: memref<16x128xbf16, #tpu.memory_space<vmem>>) attributes {dimension_semantics = [#tpu.dimension_semantics<parallel>], iteration_bounds = array<i64: 1>, scalar_prefetch = 0 : i64, scratch_operands = 0 : i64, tpu.core_type = #tpu.core_type<tc>, window_params = [{transform_indices = @transform_0, window_bounds = array<i64: 16, 32>}, {pipeline_mode = #tpu.pipeline_mode<synchronous>, transform_indices = @transform_1, window_bounds = array<i64: 32, 128>}, {pipeline_mode = #tpu.pipeline_mode<synchronous>, transform_indices = @transform_2, window_bounds = array<i64: 1, 128>}, {transform_indices = @transform_3, window_bounds = array<i64: 16, 128>}]} {
    %c0 = arith.constant 0 : index
    %c0_0 = arith.constant 0 : index
    %0 = vector.load %arg1[%c0, %c0_0] : memref<16x32xf32, #tpu.memory_space<vmem>>, vector<16x32xf32>
    %1 = arith.truncf %0 : vector<16x32xf32> to vector<16x32xbf16>
    %c0_1 = arith.constant 0 : index
    %c0_2 = arith.constant 0 : index
    %2 = vector.load %arg2[%c0_1, %c0_2] : memref<32x128xbf16, #tpu.memory_space<vmem>>, vector<32x128xbf16>
    %cst = arith.constant dense<0.000000e+00> : vector<16x128xf32>
    %3 = tpu.matmul %1, %2, %cst {dimension_numbers = #tpu.dot_dimension_numbers<[1], [0], [0], [1], [0, 0, 1, 1], [], []>} : vector<16x32xbf16>, vector<32x128xbf16>, vector<16x128xf32> -> vector<16x128xf32>
    %c0_3 = arith.constant 0 : index
    %c0_4 = arith.constant 0 : index
    %4 = vector.load %arg3[%c0_3, %c0_4] : memref<1x128xf32, #tpu.memory_space<vmem>>, vector<1x128xf32>
    %5 = vector.broadcast %4 : vector<1x128xf32> to vector<16x128xf32>
    %6 = arith.addf %3, %5 : vector<16x128xf32>
    %7 = arith.truncf %6 : vector<16x128xf32> to vector<16x128xbf16>
    %c0_5 = arith.constant 0 : index
    %c0_6 = arith.constant 0 : index
    %8 = vector.load %arg4[%c0_5, %c0_6] : memref<16x128xbf16, #tpu.memory_space<vmem>>, vector<16x128xbf16>
    tpu.vector_store %arg4[%c0_5, %c0_6], %7 {strides = array<i32>} : memref<16x128xbf16, #tpu.memory_space<vmem>>, vector<16x128xbf16>,
    return
  }
  func.func @transform_0(%arg0: i32) -> (i32, i32) {
    %c0_i32 = arith.constant 0 : i32
    %c0_i32_0 = arith.constant 0 : i32
    return %arg0, %c0_i32 : i32, i32
  }
  func.func @transform_1(%arg0: i32) -> (i32, i32) {
    %c0_i32 = arith.constant 0 : i32
    %c0_i32_0 = arith.constant 0 : i32
    %c0_i32_1 = arith.constant 0 : i32
    return %c0_i32, %c0_i32_0 : i32, i32
  }
  func.func @transform_2(%arg0: i32) -> (i32, i32) {
    %c0_i32 = arith.constant 0 : i32
    %c0_i32_0 = arith.constant 0 : i32
    %c0_i32_1 = arith.constant 0 : i32
    return %c0_i32, %c0_i32_0 : i32, i32
  }
  func.func @transform_3(%arg0: i32) -> (i32, i32) {
    %c0_i32 = arith.constant 0 : i32
    %c0_i32_0 = arith.constant 0 : i32
    return %arg0, %c0_i32 : i32, i32
  }
}

</mosaic_0001>

<llo_original>
// kernel: tpu_custom_call.1
$region0: #{tpu_custom_call.1}
  #allocation0 [shape = 'u32[]', space=smem, size = 0x4, offset = 0x4, fixed_abs, tag = 'smem constant byte address 0x4 - core index']
  #allocation1 [shape = 'u32[72,128]{1,0:T(1,128)}', space=vmem, size = 0x9000, scoped, tag = 'internal scratch']
  %s0 = inlined_call_operand.hbm [shape: f32[8,32], index: 0, kind: input, shape index: {}]
  %s1 = inlined_call_operand.hbm [shape: bf16[32,128], index: 1, kind: input, shape index: {}]
  %s2 = inlined_call_operand.vmem [shape: f32[1,128], index: 2, kind: input, shape index: {}]
  %s3 = inlined_call_operand.hbm [shape: bf16[8,128], index: 3, kind: output, shape index: {}]
  %s4 = sld [smem:[#allocation0]]
  $region30: #{tpu_custom_call.1} parent=0
    _
  %s6 = ssub.s32 1, %s4
  %s7 = scalar_select 0, %s6, %s4
  $region1: #{tpu_custom_call.1} parent=0
    #allocation2 [shape = 'u8[8192]{0}', space=vmem, size = 0x2000, scoped, tag = 'input window, operand 0, single buffered']
    #allocation3 [shape = 's32[1]{0}', space=sflag, size = 0x4, scoped, tag = 'scoped memory for tpu_custom_call.1']
    #allocation4 [shape = 's32[1]{0}', space=sflag, size = 0x4, scoped, tag = 'scoped memory for tpu_custom_call.1']
    #allocation5 [shape = 'u8[8192]{0}', space=vmem, size = 0x2000, scoped, tag = 'input window, operand 1, single buffered']
    #allocation6 [shape = 's32[1]{0}', space=sflag, size = 0x4, scoped, tag = 'scoped memory for tpu_custom_call.1']
    #allocation7 [shape = 'u8[4096]{0}', space=vmem, size = 0x1000, scoped, tag = 'output window, operand 0, single buffered']
    %8 = vsyncpa [#allocation3], 0
    %9 = vsyncpa [#allocation6], 0
    %10 = vsyncpa [#allocation4], 0
    // Predicated region
    $region2: #{tpu_custom_call.1} parent=1 // pred_check
      _
    $region3: #{tpu_custom_call.1} parent=1 // pred_check_branch
      %12 = sbr.rel (0) target = $region5
    $region4: #{tpu_custom_call.1} parent=1 // pred_region
      %14 = vsyncadd [#allocation3], 128
      %s15 = sshll.u32 %s0, 4
      %s16 = int_to_ptr.hbm [resolvable:$true] %s15
      %s17 = sshll.u32 [#allocation2], 4
      %s18 = int_to_ptr.vmem [resolvable:$true] %s17
      %23 = dma.hbm_to_vmem [thread:$0]  %s16, 128, %s18, [#allocation3], 128, 128, 8
    $region5: #{tpu_custom_call.1} parent=1 // pred_fallthru
      _
    // Predicated region
    $region6: #{tpu_custom_call.1} parent=1 // pred_check
      _
    $region7: #{tpu_custom_call.1} parent=1 // pred_check_branch
      %25 = sbr.rel (0) target = $region9
    $region8: #{tpu_custom_call.1} parent=1 // pred_region
      %27 = vsyncadd [#allocation6], 0
      %s28 = sshll.u32 %s1, 4
      %s29 = int_to_ptr.hbm [resolvable:$true] %s28
      %s30 = sshll.u32 [#allocation5], 4
      %s31 = int_to_ptr.vmem [resolvable:$true] %s30
      %36 = dma.hbm_to_vmem [thread:$0]  %s29, 256, %s31, [#allocation6], 64, 64, 4
    $region9: #{tpu_custom_call.1} parent=1 // pred_fallthru
      _
    // Predicated region
    $region10: #{tpu_custom_call.1} parent=1 // pred_check
      _
    $region11: #{tpu_custom_call.1} parent=1 // pred_check_branch
      %38 = sbr.rel (0) target = $region13
    $region12: #{tpu_custom_call.1} parent=1 // pred_region
      _
    $region13: #{tpu_custom_call.1} parent=1 // pred_fallthru
      _
    // Predicated region
    $region14: #{tpu_custom_call.1} parent=1 // pred_check
      _
    $region15: #{tpu_custom_call.1} parent=1 // pred_check_branch
      %40 = sbr.rel (0) target = $region17
    $region16: #{tpu_custom_call.1} parent=1 // pred_region
      %42 = dma.done [#allocation3], 256
    $region17: #{tpu_custom_call.1} parent=1 // pred_fallthru
      _
    // Predicated region
    $region18: #{tpu_custom_call.1} parent=1 // pred_check
      _
    $region19: #{tpu_custom_call.1} parent=1 // pred_check_branch
      %44 = sbr.rel (0) target = $region21
    $region20: #{tpu_custom_call.1} parent=1 // pred_region
      %46 = dma.done [#allocation6], 256
    $region21: #{tpu_custom_call.1} parent=1 // pred_fallthru
      _
    %v48 = vld [vmem:[#allocation2] sm:$0xff]
    %v49 = vld [vmem:[#allocation2 + $0x8] sm:$0xff]
    %v50 = vpack.c.bf16 %v49, %v48
    %v51 = vld [vmem:[#allocation5] sm:$0xf]
    %v52 = vld [vmem:[#allocation5 + $0x4] sm:$0xf]
    %v53 = vld [vmem:[#allocation5 + $0x8] sm:$0xf]
    %v54 = vld [vmem:[#allocation5 + $0xc] sm:$0xf]
    %v55 = vld [vmem:[%s2] sm:$0x1]
    %v57 = vperm.slane %v55, 0
    %v63 = vunpack.c.l.b16 %v51
    %v64 = vunpack.c.l.b16 %v52
    %v65 = vunpack.c.l.b16 %v53
    %v66 = vunpack.c.l.b16 %v54
    %v67 = vpack.c.b16 %v64, %v63
    %v68 = vpack.c.b16 %v66, %v65
    %vm71 = vcmask 261120
    %v73 = vsel %vm71, %v50, 0
    %75 = vmatpush.bf16.msra.mxu0 0
    %76 = vmatpush.bf16.msra.mxu0 0
    %77 = vmatpush.bf16.msra.mxu0 0
    %78 = vmatpush.bf16.msra.mxu0 0
    %79 = vmatpush.bf16.msra.mxu0 0
    %80 = vmatpush.bf16.msra.mxu0 0
    %81 = vmatpush.bf16.msra.mxu0 %v68
    %82 = vmatpush.bf16.msra.mxu0 %v67
    %83 = vmatmul.bf16.gmra.mxu0 %v73
    %v84 = vpop.f32.mrf.mxu0
    %v85 = vadd.f32 %v57, %v84
    %v86 = vpop.f32.mrf.mxu0
    %v87 = vadd.f32 %v57, %v86
    %88 = vdwg.mxu0
    %v89 = vpack.c.bf16 %v85, %v85
    %v90 = vpack.c.bf16 %v87, %v87
    %91 = vst [vmem:[#allocation7] sm:$0xf] %v89
    %92 = vst [vmem:[#allocation7 + $0x4] sm:$0xf] %v90
    // Predicated region
    $region22: #{tpu_custom_call.1} parent=1 // pred_check
      _
    $region23: #{tpu_custom_call.1} parent=1 // pred_check_branch
      %94 = sbr.rel (0) target = $region25
    $region24: #{tpu_custom_call.1} parent=1 // pred_region
      %96 = vsyncadd [#allocation4], 64
      %s97 = sshll.u32 [#allocation7], 4
      %s98 = int_to_ptr.vmem [resolvable:$true] %s97
      %s99 = sshll.u32 %s3, 4
      %s100 = int_to_ptr.hbm [resolvable:$true] %s99
      %105 = dma.vmem_to_hbm [thread:$0]  %s98, 64, %s100, [#allocation4], 64, 64, 4
    $region25: #{tpu_custom_call.1} parent=1 // pred_fallthru
      _
    // Predicated region
    $region26: #{tpu_custom_call.1} parent=1 // pred_check
      _
    $region27: #{tpu_custom_call.1} parent=1 // pred_check_branch
      %107 = sbr.rel (0) target = $region29
    $region28: #{tpu_custom_call.1} parent=1 // pred_region
      %109 = dma.done [#allocation4], 128
    $region29: #{tpu_custom_call.1} parent=1 // pred_fallthru
      _
    %110 = vsyncpa [#allocation3], 1
    %111 = vsyncpa [#allocation6], 1
    %112 = vsyncpa [#allocation4], 1

</llo_original>
